<compile_context>
chip_gen: v5e
topology: v5e:2x2
jax: 0.10.0
libtpu: 0.0.40
codegen_flags: <defaults>
</compile_context>

<pallas_src>
import functools

import jax
import jax.numpy as jnp
from jax.experimental import pallas as pl
from jax.experimental.pallas import tpu as pltpu

# ---------------- config ----------------
ATOM_DIM = 8
ATOM_HID_DIM = 32
MLP_HIDDEN_DIM = 64
NUM_CLASSES = 4
NUM_BLOCK = 3
LN_EPS = 1e-5


# ---------------- fused kernel ----------------
def fused_kernel(x_ref, adj_ref, keep_ref,
                 w0_ref, b0_ref, g_ref, bln_ref,
                 wblk_ref, bblk_ref,
                 w1_ref, b1_ref, w2_ref, b2_ref,
                 out_ref):
  """init Linear+LN+ReLU -> NUM_BLOCK GCN layers (block-diag adjacency, so
  every matmul is a flat 2-D MXU op) -> masked sum-pool via one MXU dot with
  a per-graph keep matrix -> MLP readout head. One kernel, one output store."""
  x = x_ref[...]                                               # [B*N, D]

  # init: Linear + LayerNorm + ReLU (Dropout = identity in eval)
  h = jnp.dot(x, w0_ref[...], preferred_element_type=jnp.float32) + b0_ref[...]
  mu = jnp.mean(h, axis=-1, keepdims=True)
  var = jnp.mean(jnp.square(h - mu), axis=-1, keepdims=True)
  h = (h - mu) * jax.lax.rsqrt(var + LN_EPS) * g_ref[...] + bln_ref[...]
  h = jnp.maximum(h, 0.0)                                      # [B*N, H]

  adj = adj_ref[...]                                           # [B*N, B*N] block-diag
  acc = h                                                      # sum(history_embeds)
  for i in range(NUM_BLOCK):                                   # static unroll
    support = jnp.dot(h, wblk_ref[i], preferred_element_type=jnp.float32)
    h = jnp.dot(adj, support, preferred_element_type=jnp.float32) + bblk_ref[i]
    acc = acc + h

  # masked_fill(masks, 0) + per-graph sum over atoms, as one MXU dot:
  #   pooled[b, :] = sum_n keep[b, n] * acc[b*N+n, :]
  pooled = jnp.dot(keep_ref[...], acc, preferred_element_type=jnp.float32)  # [B, H]

  # MLP head: Linear -> ReLU -> Linear (fused; no HBM round-trip of `pooled`)
  z = jnp.dot(pooled, w1_ref[...], preferred_element_type=jnp.float32) + b1_ref[...]
  z = jnp.maximum(z, 0.0)
  scores = jnp.dot(z, w2_ref[...], preferred_element_type=jnp.float32) + b2_ref[...]
  out_ref[...] = scores.astype(out_ref.dtype)                  # [B, NUM_CLASSES]


# ---------------- wrapper ----------------
def my_model_scores(params, embeds, adjs, masks):
  B, N, D = embeds.shape

  # Flatten atoms over the batch -> big-M MXU matmuls inside the kernel.
  x_flat = embeds.reshape(B * N, D).astype(jnp.float32)

  # Block-diagonal adjacency: adj_bd[b*N+i, c*N+j] = adjs[b,i,j] if b==c else 0.
  eye_b = jnp.eye(B, dtype=jnp.float32)
  adj_bd = jnp.einsum("bc,bij->bicj", eye_b, adjs.astype(jnp.float32))
  adj_bd = adj_bd.reshape(B * N, B * N)

  # keep_mat[b, c*N+n] = (b==c) * (1 - masks[c, n])  (True = padded atom)
  keep = 1.0 - masks.astype(jnp.float32)
  keep_mat = jnp.einsum("bc,cn->bcn", eye_b, keep).reshape(B, B * N)

  vmem = pl.BlockSpec(memory_space=pltpu.MemorySpace.VMEM)
  scores = pl.pallas_call(
      fused_kernel,
      out_shape=jax.ShapeDtypeStruct((B, NUM_CLASSES), jnp.float32),
      in_specs=[vmem] * 13,
      out_specs=vmem,
  )(x_flat, adj_bd, keep_mat,
    params["w0"], params["b0"], params["ln_g"], params["ln_b"],
    params["wblk"], params["bblk"],
    params["mlp_w1"], params["mlp_b1"], params["mlp_w2"], params["mlp_b2"])
  return scores


def my_model_forward(params, embeds, adjs, masks, targets):
  scores = my_model_scores(params, embeds, adjs, masks)        # [B, NUM_CLASSES]
  # TODO(synk): myloss.MyLoss is not defined in the source; assuming softmax
  # cross-entropy over NUM_CLASSES here (plain JAX, not the hot path).
  logz = jax.nn.logsumexp(scores, axis=-1)
  tgt_logit = jnp.take_along_axis(scores, targets[:, None], axis=-1)[:, 0]
  loss = jnp.mean(logz - tgt_logit)
  return scores, loss


# ---------------- deterministic parameter init ----------------
def make_params(key):
  ks = jax.random.split(key, 8)

  def xavier(k, shape):
    fan_in, fan_out = shape[-2], shape[-1]
    limit = jnp.sqrt(6.0 / (fan_in + fan_out))
    return jax.random.uniform(k, shape, jnp.float32, -limit, limit)

  return {
      # init: Linear(ATOM_DIM -> ATOM_HID_DIM) + LayerNorm
      "w0": xavier(ks[0], (ATOM_DIM, ATOM_HID_DIM)),
      "b0": jnp.zeros((1, ATOM_HID_DIM), jnp.float32),
      "ln_g": jnp.ones((1, ATOM_HID_DIM), jnp.float32),
      "ln_b": jnp.zeros((1, ATOM_HID_DIM), jnp.float32),
      # GCN blocks (stacked)
      "wblk": xavier(ks[1], (NUM_BLOCK, ATOM_HID_DIM, ATOM_HID_DIM)),
      "bblk": jnp.zeros((NUM_BLOCK, 1, ATOM_HID_DIM), jnp.float32),
      # MLP head
      "mlp_w1": xavier(ks[2], (ATOM_HID_DIM, MLP_HIDDEN_DIM)),
      "mlp_b1": jnp.zeros((1, MLP_HIDDEN_DIM), jnp.float32),
      "mlp_w2": xavier(ks[3], (MLP_HIDDEN_DIM, NUM_CLASSES)),
      "mlp_b2": jnp.zeros((1, NUM_CLASSES), jnp.float32),
  }


if __name__ == "__main__":
  B, N = 2, 16
  key = jax.random.PRNGKey(0)
  k_emb, k_adj, k_tgt, k_par = jax.random.split(key, 4)

  params = make_params(k_par)

  embeds = jax.random.normal(k_emb, (B, N, ATOM_DIM), jnp.float32)
  # symmetric, row-normalized-ish adjacency
  a = jax.random.uniform(k_adj, (B, N, N), jnp.float32)
  adjs = (a + jnp.swapaxes(a, 1, 2)) * 0.5 / N
  # True = padded atom (batch 0: last 4 padded, batch 1: last 2 padded)
  idx = jnp.arange(N)[None, :]
  masks = idx >= jnp.array([[N - 4], [N - 2]])
  targets = jax.random.randint(k_tgt, (B,), 0, NUM_CLASSES)

  fwd = jax.jit(functools.partial(my_model_forward, params))
  scores, loss = fwd(embeds, adjs, masks, targets)
  jax.block_until_ready((scores, loss))
  assert scores.shape == (B, NUM_CLASSES)
  assert jnp.isfinite(loss)
  print("KERNEL_OK")
</pallas_src>

<mosaic_0001>
module attributes {stable_mosaic.version = 11 : i64} {
  func.func @fused_kernel(%arg0: memref<32x8xf32, #tpu.memory_space<vmem>>, %arg1: memref<32x32xf32, #tpu.memory_space<vmem>>, %arg2: memref<2x32xf32, #tpu.memory_space<vmem>>, %arg3: memref<8x32xf32, #tpu.memory_space<vmem>>, %arg4: memref<1x32xf32, #tpu.memory_space<vmem>>, %arg5: memref<1x32xf32, #tpu.memory_space<vmem>>, %arg6: memref<1x32xf32, #tpu.memory_space<vmem>>, %arg7: memref<3x32x32xf32, #tpu.memory_space<vmem>>, %arg8: memref<3x1x32xf32, #tpu.memory_space<vmem>>, %arg9: memref<32x64xf32, #tpu.memory_space<vmem>>, %arg10: memref<1x64xf32, #tpu.memory_space<vmem>>, %arg11: memref<64x4xf32, #tpu.memory_space<vmem>>, %arg12: memref<1x4xf32, #tpu.memory_space<vmem>>, %arg13: memref<2x4xf32, #tpu.memory_space<vmem>>) attributes {dimension_semantics = [], scalar_prefetch = 0 : i64, scratch_operands = 0 : i64, tpu.core_type = #tpu.core_type<tc>} {
    %c0 = arith.constant 0 : index
    %c0_0 = arith.constant 0 : index
    %0 = vector.load %arg0[%c0, %c0_0] : memref<32x8xf32, #tpu.memory_space<vmem>>, vector<32x8xf32>
    %c0_1 = arith.constant 0 : index
    %c0_2 = arith.constant 0 : index
    %1 = vector.load %arg3[%c0_1, %c0_2] : memref<8x32xf32, #tpu.memory_space<vmem>>, vector<8x32xf32>
    %cst = arith.constant dense<0.000000e+00> : vector<32x32xf32>
    %2 = tpu.matmul %0, %1, %cst {dimension_numbers = #tpu.dot_dimension_numbers<[1], [0], [0], [1], [0, 0, 1, 1], [], []>} : vector<32x8xf32>, vector<8x32xf32>, vector<32x32xf32> -> vector<32x32xf32>
    %c0_3 = arith.constant 0 : index
    %c0_4 = arith.constant 0 : index
    %3 = vector.load %arg4[%c0_3, %c0_4] : memref<1x32xf32, #tpu.memory_space<vmem>>, vector<1x32xf32>
    %4 = vector.broadcast %3 : vector<1x32xf32> to vector<32x32xf32>
    %5 = arith.addf %2, %4 : vector<32x32xf32>
    %cst_5 = arith.constant dense<0.000000e+00> : vector<32xf32>
    %6 = vector.multi_reduction <add>, %5, %cst_5 [1] : vector<32x32xf32> to vector<32xf32>
    %7 = vector.shape_cast %6 : vector<32xf32> to vector<32x1xf32>
    %cst_6 = arith.constant 3.200000e+01 : f32
    %8 = vector.broadcast %cst_6 : f32 to vector<32x1xf32>
    %9 = arith.divf %7, %8 : vector<32x1xf32>
    %10 = vector.broadcast %9 : vector<32x1xf32> to vector<32x32xf32>
    %11 = arith.subf %5, %10 : vector<32x32xf32>
    %12 = arith.mulf %11, %11 : vector<32x32xf32>
    %cst_7 = arith.constant dense<0.000000e+00> : vector<32xf32>
    %13 = vector.multi_reduction <add>, %12, %cst_7 [1] : vector<32x32xf32> to vector<32xf32>
    %14 = vector.shape_cast %13 : vector<32xf32> to vector<32x1xf32>
    %cst_8 = arith.constant 3.200000e+01 : f32
    %15 = vector.broadcast %cst_8 : f32 to vector<32x1xf32>
    %16 = arith.divf %14, %15 : vector<32x1xf32>
    %17 = vector.broadcast %9 : vector<32x1xf32> to vector<32x32xf32>
    %18 = arith.subf %5, %17 : vector<32x32xf32>
    %cst_9 = arith.constant 9.99999974E-6 : f32
    %19 = vector.broadcast %cst_9 : f32 to vector<32x1xf32>
    %20 = arith.addf %16, %19 : vector<32x1xf32>
    %21 = math.rsqrt %20 : vector<32x1xf32>
    %22 = vector.broadcast %21 : vector<32x1xf32> to vector<32x32xf32>
    %23 = arith.mulf %18, %22 : vector<32x32xf32>
    %c0_10 = arith.constant 0 : index
    %c0_11 = arith.constant 0 : index
    %24 = vector.load %arg5[%c0_10, %c0_11] : memref<1x32xf32, #tpu.memory_space<vmem>>, vector<1x32xf32>
    %25 = vector.broadcast %24 : vector<1x32xf32> to vector<32x32xf32>
    %26 = arith.mulf %23, %25 : vector<32x32xf32>
    %c0_12 = arith.constant 0 : index
    %c0_13 = arith.constant 0 : index
    %27 = vector.load %arg6[%c0_12, %c0_13] : memref<1x32xf32, #tpu.memory_space<vmem>>, vector<1x32xf32>
    %28 = vector.broadcast %27 : vector<1x32xf32> to vector<32x32xf32>
    %29 = arith.addf %26, %28 : vector<32x32xf32>
    %cst_14 = arith.constant 0.000000e+00 : f32
    %30 = vector.broadcast %cst_14 : f32 to vector<32x32xf32>
    %31 = arith.maximumf %29, %30 : vector<32x32xf32>
    %c0_15 = arith.constant 0 : index
    %c0_16 = arith.constant 0 : index
    %32 = vector.load %arg1[%c0_15, %c0_16] : memref<32x32xf32, #tpu.memory_space<vmem>>, vector<32x32xf32>
    %c0_17 = arith.constant 0 : index
    %c0_18 = arith.constant 0 : index
    %c0_19 = arith.constant 0 : index
    %33 = vector.load %arg7[%c0_17, %c0_18, %c0_19] : memref<3x32x32xf32, #tpu.memory_space<vmem>>, vector<1x32x32xf32>
    %34 = vector.shape_cast %33 : vector<1x32x32xf32> to vector<32x32xf32>
    %cst_20 = arith.constant dense<0.000000e+00> : vector<32x32xf32>
    %35 = tpu.matmul %31, %34, %cst_20 {dimension_numbers = #tpu.dot_dimension_numbers<[1], [0], [0], [1], [0, 0, 1, 1], [], []>} : vector<32x32xf32>, vector<32x32xf32>, vector<32x32xf32> -> vector<32x32xf32>
    %cst_21 = arith.constant dense<0.000000e+00> : vector<32x32xf32>
    %36 = tpu.matmul %32, %35, %cst_21 {dimension_numbers = #tpu.dot_dimension_numbers<[1], [0], [0], [1], [0, 0, 1, 1], [], []>} : vector<32x32xf32>, vector<32x32xf32>, vector<32x32xf32> -> vector<32x32xf32>
    %c0_22 = arith.constant 0 : index
    %c0_23 = arith.constant 0 : index
    %c0_24 = arith.constant 0 : index
    %37 = vector.load %arg8[%c0_22, %c0_23, %c0_24] : memref<3x1x32xf32, #tpu.memory_space<vmem>>, vector<1x1x32xf32>
    %38 = vector.shape_cast %37 : vector<1x1x32xf32> to vector<1x32xf32>
    %39 = vector.broadcast %38 : vector<1x32xf32> to vector<32x32xf32>
    %40 = arith.addf %36, %39 : vector<32x32xf32>
    %41 = arith.addf %31, %40 : vector<32x32xf32>
    %c1 = arith.constant 1 : index
    %c0_25 = arith.constant 0 : index
    %c0_26 = arith.constant 0 : index
    %42 = vector.load %arg7[%c1, %c0_25, %c0_26] : memref<3x32x32xf32, #tpu.memory_space<vmem>>, vector<1x32x32xf32>
    %43 = vector.shape_cast %42 : vector<1x32x32xf32> to vector<32x32xf32>
    %cst_27 = arith.constant dense<0.000000e+00> : vector<32x32xf32>
    %44 = tpu.matmul %40, %43, %cst_27 {dimension_numbers = #tpu.dot_dimension_numbers<[1], [0], [0], [1], [0, 0, 1, 1], [], []>} : vector<32x32xf32>, vector<32x32xf32>, vector<32x32xf32> -> vector<32x32xf32>
    %cst_28 = arith.constant dense<0.000000e+00> : vector<32x32xf32>
    %45 = tpu.matmul %32, %44, %cst_28 {dimension_numbers = #tpu.dot_dimension_numbers<[1], [0], [0], [1], [0, 0, 1, 1], [], []>} : vector<32x32xf32>, vector<32x32xf32>, vector<32x32xf32> -> vector<32x32xf32>
    %c1_29 = arith.constant 1 : index
    %c0_30 = arith.constant 0 : index
    %c0_31 = arith.constant 0 : index
    %46 = vector.load %arg8[%c1_29, %c0_30, %c0_31] : memref<3x1x32xf32, #tpu.memory_space<vmem>>, vector<1x1x32xf32>
    %47 = vector.shape_cast %46 : vector<1x1x32xf32> to vector<1x32xf32>
    %48 = vector.broadcast %47 : vector<1x32xf32> to vector<32x32xf32>
    %49 = arith.addf %45, %48 : vector<32x32xf32>
    %50 = arith.addf %41, %49 : vector<32x32xf32>
    %c2 = arith.constant 2 : index
    %c0_32 = arith.constant 0 : index
    %c0_33 = arith.constant 0 : index
    %51 = vector.load %arg7[%c2, %c0_32, %c0_33] : memref<3x32x32xf32, #tpu.memory_space<vmem>>, vector<1x32x32xf32>
    %52 = vector.shape_cast %51 : vector<1x32x32xf32> to vector<32x32xf32>
    %cst_34 = arith.constant dense<0.000000e+00> : vector<32x32xf32>
    %53 = tpu.matmul %49, %52, %cst_34 {dimension_numbers = #tpu.dot_dimension_numbers<[1], [0], [0], [1], [0, 0, 1, 1], [], []>} : vector<32x32xf32>, vector<32x32xf32>, vector<32x32xf32> -> vector<32x32xf32>
    %cst_35 = arith.constant dense<0.000000e+00> : vector<32x32xf32>
    %54 = tpu.matmul %32, %53, %cst_35 {dimension_numbers = #tpu.dot_dimension_numbers<[1], [0], [0], [1], [0, 0, 1, 1], [], []>} : vector<32x32xf32>, vector<32x32xf32>, vector<32x32xf32> -> vector<32x32xf32>
    %c2_36 = arith.constant 2 : index
    %c0_37 = arith.constant 0 : index
    %c0_38 = arith.constant 0 : index
    %55 = vector.load %arg8[%c2_36, %c0_37, %c0_38] : memref<3x1x32xf32, #tpu.memory_space<vmem>>, vector<1x1x32xf32>
    %56 = vector.shape_cast %55 : vector<1x1x32xf32> to vector<1x32xf32>
    %57 = vector.broadcast %56 : vector<1x32xf32> to vector<32x32xf32>
    %58 = arith.addf %54, %57 : vector<32x32xf32>
    %59 = arith.addf %50, %58 : vector<32x32xf32>
    %c0_39 = arith.constant 0 : index
    %c0_40 = arith.constant 0 : index
    %60 = vector.load %arg2[%c0_39, %c0_40] : memref<2x32xf32, #tpu.memory_space<vmem>>, vector<2x32xf32>
    %cst_41 = arith.constant dense<0.000000e+00> : vector<2x32xf32>
    %61 = tpu.matmul %60, %59, %cst_41 {dimension_numbers = #tpu.dot_dimension_numbers<[1], [0], [0], [1], [0, 0, 1, 1], [], []>} : vector<2x32xf32>, vector<32x32xf32>, vector<2x32xf32> -> vector<2x32xf32>
    %c0_42 = arith.constant 0 : index
    %c0_43 = arith.constant 0 : index
    %62 = vector.load %arg9[%c0_42, %c0_43] : memref<32x64xf32, #tpu.memory_space<vmem>>, vector<32x64xf32>
    %cst_44 = arith.constant dense<0.000000e+00> : vector<2x64xf32>
    %63 = tpu.matmul %61, %62, %cst_44 {dimension_numbers = #tpu.dot_dimension_numbers<[1], [0], [0], [1], [0, 0, 1, 1], [], []>} : vector<2x32xf32>, vector<32x64xf32>, vector<2x64xf32> -> vector<2x64xf32>
    %c0_45 = arith.constant 0 : index
    %c0_46 = arith.constant 0 : index
    %64 = vector.load %arg10[%c0_45, %c0_46] : memref<1x64xf32, #tpu.memory_space<vmem>>, vector<1x64xf32>
    %65 = vector.broadcast %64 : vector<1x64xf32> to vector<2x64xf32>
    %66 = arith.addf %63, %65 : vector<2x64xf32>
    %cst_47 = arith.constant 0.000000e+00 : f32
    %67 = vector.broadcast %cst_47 : f32 to vector<2x64xf32>
    %68 = arith.maximumf %66, %67 : vector<2x64xf32>
    %c0_48 = arith.constant 0 : index
    %c0_49 = arith.constant 0 : index
    %69 = vector.load %arg11[%c0_48, %c0_49] : memref<64x4xf32, #tpu.memory_space<vmem>>, vector<64x4xf32>
    %cst_50 = arith.constant dense<0.000000e+00> : vector<2x4xf32>
    %70 = tpu.matmul %68, %69, %cst_50 {dimension_numbers = #tpu.dot_dimension_numbers<[1], [0], [0], [1], [0, 0, 1, 1], [], []>} : vector<2x64xf32>, vector<64x4xf32>, vector<2x4xf32> -> vector<2x4xf32>
    %c0_51 = arith.constant 0 : index
    %c0_52 = arith.constant 0 : index
    %71 = vector.load %arg12[%c0_51, %c0_52] : memref<1x4xf32, #tpu.memory_space<vmem>>, vector<1x4xf32>
    %72 = vector.broadcast %71 : vector<1x4xf32> to vector<2x4xf32>
    %73 = arith.addf %70, %72 : vector<2x4xf32>
    %c0_53 = arith.constant 0 : index
    %c0_54 = arith.constant 0 : index
    %74 = vector.load %arg13[%c0_53, %c0_54] : memref<2x4xf32, #tpu.memory_space<vmem>>, vector<2x4xf32>
    tpu.vector_store %arg13[%c0_53, %c0_54], %73 {strides = array<i32>} : memref<2x4xf32, #tpu.memory_space<vmem>>, vector<2x4xf32>,
    return
  }
}

</mosaic_0001>

<llo_original>
// kernel: my_model_forward.1
$region0: #{my_model_forward.1}
  #allocation0 [shape = 'u32[]', space=smem, size = 0x4, offset = 0x4, fixed_abs, tag = 'smem constant byte address 0x4 - core index']
  #allocation1 [shape = 'u32[72,128]{1,0:T(1,128)}', space=vmem, size = 0x9000, scoped, tag = 'internal scratch']
  %s0 = inlined_call_operand.vmem [shape: f32[32,8], index: 0, kind: input, shape index: {}]
  %s1 = inlined_call_operand.vmem [shape: f32[32,32], index: 1, kind: input, shape index: {}]
  %s2 = inlined_call_operand.vmem [shape: f32[2,32], index: 2, kind: input, shape index: {}]
  %s3 = inlined_call_operand.vmem [shape: f32[8,32], index: 3, kind: input, shape index: {}]
  %s4 = inlined_call_operand.vmem [shape: f32[1,32], index: 4, kind: input, shape index: {}, may-alias: {4,6}]
  %s5 = inlined_call_operand.vmem [shape: f32[1,32], index: 5, kind: input, shape index: {}]
  %s6 = inlined_call_operand.vmem [shape: f32[1,32], index: 6, kind: input, shape index: {}, may-alias: {4,6}]
  %s7 = inlined_call_operand.vmem [shape: f32[3,32,32], index: 7, kind: input, shape index: {}]
  %s8 = inlined_call_operand.vmem [shape: f32[3,1,32], index: 8, kind: input, shape index: {}]
  %s9 = inlined_call_operand.vmem [shape: f32[32,64], index: 9, kind: input, shape index: {}]
  %s10 = inlined_call_operand.vmem [shape: f32[1,64], index: 10, kind: input, shape index: {}]
  %s11 = inlined_call_operand.vmem [shape: f32[64,4], index: 11, kind: input, shape index: {}]
  %s12 = inlined_call_operand.vmem [shape: f32[1,4], index: 12, kind: input, shape index: {}]
  %s13 = inlined_call_operand.vmem [shape: f32[2,4], index: 13, kind: output, shape index: {}]
  %s14 = sld [smem:[#allocation0]]
  $region62: #{my_model_forward.1} parent=0
    _
  %s16 = ssub.s32 1, %s14
  %s17 = scalar_select 0, %s16, %s14
  // Predicated region
  $region2: #{my_model_forward.1} parent=0 // pred_check
    _
  $region3: #{my_model_forward.1} parent=0 // pred_check_branch
    %19 = sbr.rel (0) target = $region5
  $region4: #{my_model_forward.1} parent=0 // pred_region
    _
  $region5: #{my_model_forward.1} parent=0 // pred_fallthru
    _
  // Predicated region
  $region6: #{my_model_forward.1} parent=0 // pred_check
    _
  $region7: #{my_model_forward.1} parent=0 // pred_check_branch
    %21 = sbr.rel (0) target = $region9
  $region8: #{my_model_forward.1} parent=0 // pred_region
    _
  $region9: #{my_model_forward.1} parent=0 // pred_fallthru
    _
  // Predicated region
  $region10: #{my_model_forward.1} parent=0 // pred_check
    _
  $region11: #{my_model_forward.1} parent=0 // pred_check_branch
    %23 = sbr.rel (0) target = $region13
  $region12: #{my_model_forward.1} parent=0 // pred_region
    _
  $region13: #{my_model_forward.1} parent=0 // pred_fallthru
    _
  // Predicated region
  $region14: #{my_model_forward.1} parent=0 // pred_check
    _
  $region15: #{my_model_forward.1} parent=0 // pred_check_branch
    %25 = sbr.rel (0) target = $region17
  $region16: #{my_model_forward.1} parent=0 // pred_region
    _
  $region17: #{my_model_forward.1} parent=0 // pred_fallthru
    _
  // Predicated region
  $region18: #{my_model_forward.1} parent=0 // pred_check
    _
  $region19: #{my_model_forward.1} parent=0 // pred_check_branch
    %27 = sbr.rel (0) target = $region21
  $region20: #{my_model_forward.1} parent=0 // pred_region
    _
  $region21: #{my_model_forward.1} parent=0 // pred_fallthru
    _
  // Predicated region
  $region22: #{my_model_forward.1} parent=0 // pred_check
    _
  $region23: #{my_model_forward.1} parent=0 // pred_check_branch
    %29 = sbr.rel (0) target = $region25
  $region24: #{my_model_forward.1} parent=0 // pred_region
    _
  $region25: #{my_model_forward.1} parent=0 // pred_fallthru
    _
  // Predicated region
  $region26: #{my_model_forward.1} parent=0 // pred_check
    _
  $region27: #{my_model_forward.1} parent=0 // pred_check_branch
    %31 = sbr.rel (0) target = $region29
  $region28: #{my_model_forward.1} parent=0 // pred_region
    _
  $region29: #{my_model_forward.1} parent=0 // pred_fallthru
    _
  // Predicated region
  $region30: #{my_model_forward.1} parent=0 // pred_check
    _
  $region31: #{my_model_forward.1} parent=0 // pred_check_branch
    %33 = sbr.rel (0) target = $region33
  $region32: #{my_model_forward.1} parent=0 // pred_region
    _
  $region33: #{my_model_forward.1} parent=0 // pred_fallthru
    _
  // Predicated region
  $region34: #{my_model_forward.1} parent=0 // pred_check
    _
  $region35: #{my_model_forward.1} parent=0 // pred_check_branch
    %35 = sbr.rel (0) target = $region37
  $region36: #{my_model_forward.1} parent=0 // pred_region
    _
  $region37: #{my_model_forward.1} parent=0 // pred_fallthru
    _
  // Predicated region
  $region38: #{my_model_forward.1} parent=0 // pred_check
    _
  $region39: #{my_model_forward.1} parent=0 // pred_check_branch
    %37 = sbr.rel (0) target = $region41
  $region40: #{my_model_forward.1} parent=0 // pred_region
    _
  $region41: #{my_model_forward.1} parent=0 // pred_fallthru
    _
  // Predicated region
  $region42: #{my_model_forward.1} parent=0 // pred_check
    _
  $region43: #{my_model_forward.1} parent=0 // pred_check_branch
    %39 = sbr.rel (0) target = $region45
  $region44: #{my_model_forward.1} parent=0 // pred_region
    _
  $region45: #{my_model_forward.1} parent=0 // pred_fallthru
    _
  // Predicated region
  $region46: #{my_model_forward.1} parent=0 // pred_check
    _
  $region47: #{my_model_forward.1} parent=0 // pred_check_branch
    %41 = sbr.rel (0) target = $region49
  $region48: #{my_model_forward.1} parent=0 // pred_region
    _
  $region49: #{my_model_forward.1} parent=0 // pred_fallthru
    _
  // Predicated region
  $region50: #{my_model_forward.1} parent=0 // pred_check
    _
  $region51: #{my_model_forward.1} parent=0 // pred_check_branch
    %43 = sbr.rel (0) target = $region53
  $region52: #{my_model_forward.1} parent=0 // pred_region
    _
  $region53: #{my_model_forward.1} parent=0 // pred_fallthru
    _
  %v44 = vld [vmem:[%s0] sm:$0xff]
  %v45 = vld [vmem:[%s0 + $0x8] sm:$0xff]
  %v46 = vld [vmem:[%s0 + $0x10] sm:$0xff]
  %v47 = vld [vmem:[%s0 + $0x18] sm:$0xff]
  %v48 = vld [vmem:[%s3] sm:$0xff]
  %v49 = vld [vmem:[%s4] sm:$0x1]
  %v51 = vperm.slane %v49, 0
  %vm53 = vcmask 64512
  %v55 = vsel %vm53, %v44, 0
  %v58 = vsel %vm53, %v45, 0
  %v61 = vsel %vm53, %v46, 0
  %v64 = vsel %vm53, %v47, 0
  %66 = vmatpush.msra.mxu0 0.0
  %67 = vmatpush.msra.mxu0 0.0
  %68 = vmatpush.msra.mxu0 0.0
  %69 = vmatpush.msra.mxu0 0.0
  %70 = vmatpush.msra.mxu0 0.0
  %71 = vmatpush.msra.mxu0 0.0
  %72 = vmatpush.msra.mxu0 0.0
  %73 = vmatpush.msra.mxu0 0.0
  %74 = vmatpush.msra.mxu0 0.0
  %75 = vmatpush.msra.mxu0 0.0
  %76 = vmatpush.msra.mxu0 0.0
  %77 = vmatpush.msra.mxu0 0.0
  %78 = vmatpush.msra.mxu0 0.0
  %79 = vmatpush.msra.mxu0 0.0
  %80 = vmatpush.msra.mxu0 0.0
  %81 = vmatpush.msra.mxu0 %v48
  %82 = vmatmul.f32.gmra.mxu0 %v55
  %v83 = vpop.f32.mrf.mxu0
  %v84 = vadd.f32 %v51, %v83
  %85 = vmatmul.f32.gmra.mxu0 %v58
  %v86 = vpop.f32.mrf.mxu0
  %v87 = vadd.f32 %v51, %v86
  %88 = vmatmul.f32.gmra.mxu0 %v61
  %v89 = vpop.f32.mrf.mxu0
  %v90 = vadd.f32 %v51, %v89
  %91 = vmatmul.f32.gmra.mxu0 %v64
  %v92 = vpop.f32.mrf.mxu0
  %v93 = vadd.f32 %v51, %v92
  %94 = vdwg.mxu0
  %vm95 = vcmask 261120
  %v96 = vsel %vm95, %v84, 0.0
  %97 = vadd.xlane.f32.xlu0 %v96
  %v98 = vpop.xlane.xlu0 %97
  %v99 = vsel %vm95, %v87, 0.0
  %100 = vadd.xlane.f32.xlu0 %v99
  %v101 = vpop.xlane.xlu0 %100
  %v102 = vsel %vm95, %v90, 0.0
  %103 = vadd.xlane.f32.xlu0 %v102
  %v104 = vpop.xlane.xlu0 %103
  %v105 = vsel %vm95, %v93, 0.0
  %106 = vadd.xlane.f32.xlu0 %v105
  %v107 = vpop.xlane.xlu0 %106
  %v108 = vrcp.pop 32.0
  %v109 = vmul.f32 32.0, %v108
  %v110 = vsub.f32 1.0, %v109
  %v111 = vmul.f32 %v108, %v110
  %v112 = vadd.f32 %v108, %v111
  %vm113 = vweird.f32 %v108
  %v114 = vsel %vm113, %v108, %v112
  %v115 = vmul.f32 %v98, %v114
  %v116 = vmul.f32 %v101, %v114
  %v117 = vmul.f32 %v104, %v114
  %v118 = vmul.f32 %v107, %v114
  %v119 = vsub.f32 %v84, %v115
  %v120 = vsub.f32 %v87, %v116
  %v121 = vsub.f32 %v90, %v117
  %v122 = vsub.f32 %v93, %v118
  %v123 = vmul.f32 %v119, %v119
  %v124 = vmul.f32 %v120, %v120
  %v125 = vmul.f32 %v121, %v121
  %v126 = vmul.f32 %v122, %v122
  %v127 = vsel %vm95, %v123, 0.0
  %128 = vadd.xlane.f32.xlu0 %v127
  %v129 = vpop.xlane.xlu0 %128
  %v130 = vsel %vm95, %v124, 0.0
  %131 = vadd.xlane.f32.xlu0 %v130
  %v132 = vpop.xlane.xlu0 %131
  %v133 = vsel %vm95, %v125, 0.0
  %134 = vadd.xlane.f32.xlu0 %v133
  %v135 = vpop.xlane.xlu0 %134
  %v136 = vsel %vm95, %v126, 0.0
  %137 = vadd.xlane.f32.xlu0 %v136
  %v138 = vpop.xlane.xlu0 %137
  %v139 = vmul.f32 %v129, %v114
  %v140 = vmul.f32 %v132, %v114
  %v141 = vmul.f32 %v135, %v114
  %v142 = vmul.f32 %v138, %v114
  %v143 = vadd.f32 %v139, 1e-05
  %v144 = vadd.f32 %v140, 1e-05
  %v145 = vadd.f32 %v141, 1e-05
  %v146 = vadd.f32 %v142, 1e-05
  %v147 = vrsqrt.pop %v143
  %v148 = vmul.f32 %v147, %v143
  %v149 = vmul.f32 %v148, %v147
  %v150 = vmul.f32 0.5, %v149
  %v151 = vsub.f32 1.5, %v150
  %v152 = vmul.f32 %v147, %v151
  %vm153 = vweird.f32 %v143
  %vm154 = vweird.f32 %v147
  %vm155 = vmor %vm153, %vm154
  %v156 = vsel %vm155, %v147, %v152
  %v157 = vrsqrt.pop %v144
  %v158 = vmul.f32 %v157, %v144
  %v159 = vmul.f32 %v158, %v157
  %v160 = vmul.f32 0.5, %v159
  %v161 = vsub.f32 1.5, %v160
  %v162 = vmul.f32 %v157, %v161
  %vm163 = vweird.f32 %v144
  %vm164 = vweird.f32 %v157
  %vm165 = vmor %vm163, %vm164
  %v166 = vsel %vm165, %v157, %v162
  %v167 = vrsqrt.pop %v145
  %v168 = vmul.f32 %v167, %v145
  %v169 = vmul.f32 %v168, %v167
  %v170 = vmul.f32 0.5, %v169
  %v171 = vsub.f32 1.5, %v170
  %v172 = vmul.f32 %v167, %v171
  %vm173 = vweird.f32 %v145
  %vm174 = vweird.f32 %v167
  %vm175 = vmor %vm173, %vm174
  %v176 = vsel %vm175, %v167, %v172
  %v177 = vrsqrt.pop %v146
  %v178 = vmul.f32 %v177, %v146
  %v179 = vmul.f32 %v178, %v177
  %v180 = vmul.f32 0.5, %v179
  %v181 = vsub.f32 1.5, %v180
  %v182 = vmul.f32 %v177, %v181
  %vm183 = vweird.f32 %v146
  %vm184 = vweird.f32 %v177
  %vm185 = vmor %vm183, %vm184
  %v186 = vsel %vm185, %v177, %v182
  %v187 = vmul.f32 %v119, %v156
  %v188 = vmul.f32 %v120, %v166
  %v189 = vmul.f32 %v121, %v176
  %v190 = vmul.f32 %v122, %v186
  %v191 = vld [vmem:[%s5] sm:$0x1]
  %v193 = vperm.slane %v191, 0
  %v195 = vmul.f32 %v187, %v193
  %v196 = vmul.f32 %v188, %v193
  %v197 = vmul.f32 %v189, %v193
  %v198 = vmul.f32 %v190, %v193
  %v199 = vld [vmem:[%s6] sm:$0x1]
  %v201 = vperm.slane %v199, 0
  %v203 = vadd.f32 %v195, %v201
  %v204 = vadd.f32 %v196, %v201
  %v205 = vadd.f32 %v197, %v201
  %v206 = vadd.f32 %v198, %v201
  %v207 = vmax.f32 %v203, 0.0
  %v208 = vmax.f32 %v204, 0.0
  %v209 = vmax.f32 %v205, 0.0
  %v210 = vmax.f32 %v206, 0.0
  %v211 = vld [vmem:[%s1] sm:$0xff]
  %v212 = vld [vmem:[%s1 + $0x8] sm:$0xff]
  %v213 = vld [vmem:[%s1 + $0x10] sm:$0xff]
  %v214 = vld [vmem:[%s1 + $0x18] sm:$0xff]
  %v215 = vld [vmem:[%s7] sm:$0xff]
  %v216 = vld [vmem:[%s7 + $0x8] sm:$0xff]
  %v217 = vld [vmem:[%s7 + $0x10] sm:$0xff]
  %v218 = vld [vmem:[%s7 + $0x18] sm:$0xff]
  %v220 = vsel %vm95, %v207, 0
  %v223 = vsel %vm95, %v208, 0
  %v226 = vsel %vm95, %v209, 0
  %v229 = vsel %vm95, %v210, 0
  %231 = vmatpush.msra.mxu0 0.0
  %232 = vmatpush.msra.mxu0 0.0
  %233 = vmatpush.msra.mxu0 0.0
  %234 = vmatpush.msra.mxu0 0.0
  %235 = vmatpush.msra.mxu0 0.0
  %236 = vmatpush.msra.mxu0 0.0
  %237 = vmatpush.msra.mxu0 0.0
  %238 = vmatpush.msra.mxu0 0.0
  %239 = vmatpush.msra.mxu0 0.0
  %240 = vmatpush.msra.mxu0 0.0
  %241 = vmatpush.msra.mxu0 0.0
  %242 = vmatpush.msra.mxu0 0.0
  %243 = vmatpush.msra.mxu0 %v218
  %244 = vmatpush.msra.mxu0 %v217
  %245 = vmatpush.msra.mxu0 %v216
  %246 = vmatpush.msra.mxu0 %v215
  %247 = vmatmul.f32.gmra.mxu0 %v220
  %v248 = vpop.f32.mrf.mxu0
  %v249 = vadd.f32 0.0, %v248
  %250 = vmatmul.f32.gmra.mxu0 %v223
  %v251 = vpop.f32.mrf.mxu0
  %v252 = vadd.f32 0.0, %v251
  %253 = vmatmul.f32.gmra.mxu0 %v226
  %v254 = vpop.f32.mrf.mxu0
  %v255 = vadd.f32 0.0, %v254
  %256 = vmatmul.f32.gmra.mxu0 %v229
  %v257 = vpop.f32.mrf.mxu0
  %v258 = vadd.f32 0.0, %v257
  %259 = vdwg.mxu0
  %v260 = vld [vmem:[%s8] sm:$0x1]
  %v262 = vperm.slane %v260, 0
  %v265 = vsel %vm95, %v211, 0
  %v268 = vsel %vm95, %v212, 0
  %v271 = vsel %vm95, %v213, 0
  %v274 = vsel %vm95, %v214, 0
  %276 = vmatpush.msra.mxu0 0.0
  %277 = vmatpush.msra.mxu0 0.0
  %278 = vmatpush.msra.mxu0 0.0
  %279 = vmatpush.msra.mxu0 0.0
  %280 = vmatpush.msra.mxu0 0.0
  %281 = vmatpush.msra.mxu0 0.0
  %282 = vmatpush.msra.mxu0 0.0
  %283 = vmatpush.msra.mxu0 0.0
  %284 = vmatpush.msra.mxu0 0.0
  %285 = vmatpush.msra.mxu0 0.0
  %286 = vmatpush.msra.mxu0 0.0
  %287 = vmatpush.msra.mxu0 0.0
  %288 = vmatpush.msra.mxu0 %v258
  %289 = vmatpush.msra.mxu0 %v255
  %290 = vmatpush.msra.mxu0 %v252
  %291 = vmatpush.msra.mxu0 %v249
  %292 = vmatmul.f32.gmra.mxu0 %v265
  %v293 = vpop.f32.mrf.mxu0
  %v294 = vadd.f32 %v262, %v293
  %295 = vmatmul.f32.gmra.mxu0 %v268
  %v296 = vpop.f32.mrf.mxu0
  %v297 = vadd.f32 %v262, %v296
  %298 = vmatmul.f32.gmra.mxu0 %v271
  %v299 = vpop.f32.mrf.mxu0
  %v300 = vadd.f32 %v262, %v299
  %301 = vmatmul.f32.gmra.mxu0 %v274
  %v302 = vpop.f32.mrf.mxu0
  %v303 = vadd.f32 %v262, %v302
  %304 = vdwg.mxu0
  %v305 = vadd.f32 %v207, %v294
  %v306 = vadd.f32 %v208, %v297
  %v307 = vadd.f32 %v209, %v300
  %v308 = vadd.f32 %v210, %v303
  %s309 = scalar_lea.vmem %s7, 32
  %v310 = vld [vmem:[%s309] sm:$0xff]
  %v311 = vld [vmem:[%s309 + $0x8] sm:$0xff]
  %v312 = vld [vmem:[%s309 + $0x10] sm:$0xff]
  %v313 = vld [vmem:[%s309 + $0x18] sm:$0xff]
  %v315 = vsel %vm95, %v294, 0
  %v318 = vsel %vm95, %v297, 0
  %v321 = vsel %vm95, %v300, 0
  %v324 = vsel %vm95, %v303, 0
  %326 = vmatpush.msra.mxu0 0.0
  %327 = vmatpush.msra.mxu0 0.0
  %328 = vmatpush.msra.mxu0 0.0
  %329 = vmatpush.msra.mxu0 0.0
  %330 = vmatpush.msra.mxu0 0.0
  %331 = vmatpush.msra.mxu0 0.0
  %332 = vmatpush.msra.mxu0 0.0
  %333 = vmatpush.msra.mxu0 0.0
  %334 = vmatpush.msra.mxu0 0.0
  %335 = vmatpush.msra.mxu0 0.0
  %336 = vmatpush.msra.mxu0 0.0
  %337 = vmatpush.msra.mxu0 0.0
  %338 = vmatpush.msra.mxu0 %v313
  %339 = vmatpush.msra.mxu0 %v312
  %340 = vmatpush.msra.mxu0 %v311
  %341 = vmatpush.msra.mxu0 %v310
  %342 = vmatmul.f32.gmra.mxu0 %v315
  %v343 = vpop.f32.mrf.mxu0
  %v344 = vadd.f32 0.0, %v343
  %345 = vmatmul.f32.gmra.mxu0 %v318
  %v346 = vpop.f32.mrf.mxu0
  %v347 = vadd.f32 0.0, %v346
  %348 = vmatmul.f32.gmra.mxu0 %v321
  %v349 = vpop.f32.mrf.mxu0
  %v350 = vadd.f32 0.0, %v349
  %351 = vmatmul.f32.gmra.mxu0 %v324
  %v352 = vpop.f32.mrf.mxu0
  %v353 = vadd.f32 0.0, %v352
  %354 = vdwg.mxu0
  %s355 = scalar_lea.vmem %s8, 1
  %v356 = vld [vmem:[%s355] sm:$0x1]
  %v358 = vperm.slane %v356, 0
  %360 = vmatpush.msra.mxu0 0.0
  %361 = vmatpush.msra.mxu0 0.0
  %362 = vmatpush.msra.mxu0 0.0
  %363 = vmatpush.msra.mxu0 0.0
  %364 = vmatpush.msra.mxu0 0.0
  %365 = vmatpush.msra.mxu0 0.0
  %366 = vmatpush.msra.mxu0 0.0
  %367 = vmatpush.msra.mxu0 0.0
  %368 = vmatpush.msra.mxu0 0.0
  %369 = vmatpush.msra.mxu0 0.0
  %370 = vmatpush.msra.mxu0 0.0
  %371 = vmatpush.msra.mxu0 0.0
  %372 = vmatpush.msra.mxu0 %v353
  %373 = vmatpush.msra.mxu0 %v350
  %374 = vmatpush.msra.mxu0 %v347
  %375 = vmatpush.msra.mxu0 %v344
  %376 = vmatmul.f32.gmra.mxu0 %v265
  %v377 = vpop.f32.mrf.mxu0
  %v378 = vadd.f32 %v358, %v377
  %379 = vmatmul.f32.gmra.mxu0 %v268
  %v380 = vpop.f32.mrf.mxu0
  %v381 = vadd.f32 %v358, %v380
  %382 = vmatmul.f32.gmra.mxu0 %v271
  %v383 = vpop.f32.mrf.mxu0
  %v384 = vadd.f32 %v358, %v383
  %385 = vmatmul.f32.gmra.mxu0 %v274
  %v386 = vpop.f32.mrf.mxu0
  %v387 = vadd.f32 %v358, %v386
  %388 = vdwg.mxu0
  %v389 = vadd.f32 %v305, %v378
  %v390 = vadd.f32 %v306, %v381
  %v391 = vadd.f32 %v307, %v384
  %v392 = vadd.f32 %v308, %v387
  %s393 = scalar_lea.vmem %s7, 64
  %v394 = vld [vmem:[%s393] sm:$0xff]
  %v395 = vld [vmem:[%s393 + $0x8] sm:$0xff]
  %v396 = vld [vmem:[%s393 + $0x10] sm:$0xff]
  %v397 = vld [vmem:[%s393 + $0x18] sm:$0xff]
  %v399 = vsel %vm95, %v378, 0
  %v402 = vsel %vm95, %v381, 0
  %v405 = vsel %vm95, %v384, 0
  %v408 = vsel %vm95, %v387, 0
  %410 = vmatpush.msra.mxu0 0.0
  %411 = vmatpush.msra.mxu0 0.0
  %412 = vmatpush.msra.mxu0 0.0
  %413 = vmatpush.msra.mxu0 0.0
  %414 = vmatpush.msra.mxu0 0.0
  %415 = vmatpush.msra.mxu0 0.0
  %416 = vmatpush.msra.mxu0 0.0
  %417 = vmatpush.msra.mxu0 0.0
  %418 = vmatpush.msra.mxu0 0.0
  %419 = vmatpush.msra.mxu0 0.0
  %420 = vmatpush.msra.mxu0 0.0
  %421 = vmatpush.msra.mxu0 0.0
  %422 = vmatpush.msra.mxu0 %v397
  %423 = vmatpush.msra.mxu0 %v396
  %424 = vmatpush.msra.mxu0 %v395
  %425 = vmatpush.msra.mxu0 %v394
  %426 = vmatmul.f32.gmra.mxu0 %v399
  %v427 = vpop.f32.mrf.mxu0
  %v428 = vadd.f32 0.0, %v427
  %429 = vmatmul.f32.gmra.mxu0 %v402
  %v430 = vpop.f32.mrf.mxu0
  %v431 = vadd.f32 0.0, %v430
  %432 = vmatmul.f32.gmra.mxu0 %v405
  %v433 = vpop.f32.mrf.mxu0
  %v434 = vadd.f32 0.0, %v433
  %435 = vmatmul.f32.gmra.mxu0 %v408
  %v436 = vpop.f32.mrf.mxu0
  %v437 = vadd.f32 0.0, %v436
  %438 = vdwg.mxu0
  %s439 = scalar_lea.vmem %s8, 2
  %v440 = vld [vmem:[%s439] sm:$0x1]
  %v442 = vperm.slane %v440, 0
  %444 = vmatpush.msra.mxu0 0.0
  %445 = vmatpush.msra.mxu0 0.0
  %446 = vmatpush.msra.mxu0 0.0
  %447 = vmatpush.msra.mxu0 0.0
  %448 = vmatpush.msra.mxu0 0.0
  %449 = vmatpush.msra.mxu0 0.0
  %450 = vmatpush.msra.mxu0 0.0
  %451 = vmatpush.msra.mxu0 0.0
  %452 = vmatpush.msra.mxu0 0.0
  %453 = vmatpush.msra.mxu0 0.0
  %454 = vmatpush.msra.mxu0 0.0
  %455 = vmatpush.msra.mxu0 0.0
  %456 = vmatpush.msra.mxu0 %v437
  %457 = vmatpush.msra.mxu0 %v434
  %458 = vmatpush.msra.mxu0 %v431
  %459 = vmatpush.msra.mxu0 %v428
  %460 = vmatmul.f32.gmra.mxu0 %v265
  %v461 = vpop.f32.mrf.mxu0
  %v462 = vadd.f32 %v442, %v461
  %463 = vmatmul.f32.gmra.mxu0 %v268
  %v464 = vpop.f32.mrf.mxu0
  %v465 = vadd.f32 %v442, %v464
  %466 = vmatmul.f32.gmra.mxu0 %v271
  %v467 = vpop.f32.mrf.mxu0
  %v468 = vadd.f32 %v442, %v467
  %469 = vmatmul.f32.gmra.mxu0 %v274
  %v470 = vpop.f32.mrf.mxu0
  %v471 = vadd.f32 %v442, %v470
  %472 = vdwg.mxu0
  %v473 = vadd.f32 %v389, %v462
  %v474 = vadd.f32 %v390, %v465
  %v475 = vadd.f32 %v391, %v468
  %v476 = vadd.f32 %v392, %v471
  %v477 = vld [vmem:[%s2] sm:$0x3]
  %v479 = vsel %vm95, %v477, 0
  %481 = vmatpush.msra.mxu0 0.0
  %482 = vmatpush.msra.mxu0 0.0
  %483 = vmatpush.msra.mxu0 0.0
  %484 = vmatpush.msra.mxu0 0.0
  %485 = vmatpush.msra.mxu0 0.0
  %486 = vmatpush.msra.mxu0 0.0
  %487 = vmatpush.msra.mxu0 0.0
  %488 = vmatpush.msra.mxu0 0.0
  %489 = vmatpush.msra.mxu0 0.0
  %490 = vmatpush.msra.mxu0 0.0
  %491 = vmatpush.msra.mxu0 0.0
  %492 = vmatpush.msra.mxu0 0.0
  %493 = vmatpush.msra.mxu0 %v476
  %494 = vmatpush.msra.mxu0 %v475
  %495 = vmatpush.msra.mxu0 %v474
  %496 = vmatpush.msra.mxu0 %v473
  %497 = vmatmul.f32.gmra.mxu0 %v479
  %v498 = vpop.f32.mrf.mxu0
  %v499 = vadd.f32 0.0, %v498
  %500 = vdwg.mxu0
  %v501 = vld [vmem:[%s9] sm:$0xff]
  %v502 = vld [vmem:[%s9 + $0x8] sm:$0xff]
  %v503 = vld [vmem:[%s9 + $0x10] sm:$0xff]
  %v504 = vld [vmem:[%s9 + $0x18] sm:$0xff]
  %v505 = vld [vmem:[%s10] sm:$0x1]
  %v507 = vperm.slane %v505, 0
  %v510 = vsel %vm95, %v499, 0
  %512 = vmatpush.msra.mxu0 0.0
  %513 = vmatpush.msra.mxu0 0.0
  %514 = vmatpush.msra.mxu0 0.0
  %515 = vmatpush.msra.mxu0 0.0
  %516 = vmatpush.msra.mxu0 0.0
  %517 = vmatpush.msra.mxu0 0.0
  %518 = vmatpush.msra.mxu0 0.0
  %519 = vmatpush.msra.mxu0 0.0
  %520 = vmatpush.msra.mxu0 0.0
  %521 = vmatpush.msra.mxu0 0.0
  %522 = vmatpush.msra.mxu0 0.0
  %523 = vmatpush.msra.mxu0 0.0
  %524 = vmatpush.msra.mxu0 %v504
  %525 = vmatpush.msra.mxu0 %v503
  %526 = vmatpush.msra.mxu0 %v502
  %527 = vmatpush.msra.mxu0 %v501
  %528 = vmatmul.f32.gmra.mxu0 %v510
  %v529 = vpop.f32.mrf.mxu0
  %v530 = vadd.f32 %v507, %v529
  %531 = vdwg.mxu0
  %v532 = vmax.f32 %v530, 0.0
  %v533 = vld [vmem:[%s11] sm:$0xff]
  %v534 = vld [vmem:[%s11 + $0x8] sm:$0xff]
  %v535 = vld [vmem:[%s11 + $0x10] sm:$0xff]
  %v536 = vld [vmem:[%s11 + $0x18] sm:$0xff]
  %v537 = vld [vmem:[%s11 + $0x20] sm:$0xff]
  %v538 = vld [vmem:[%s11 + $0x28] sm:$0xff]
  %v539 = vld [vmem:[%s11 + $0x30] sm:$0xff]
  %v540 = vld [vmem:[%s11 + $0x38] sm:$0xff]
  %v541 = vld [vmem:[%s12] sm:$0x1]
  %v543 = vperm.slane %v541, 0
  %vm545 = vcmask 523264
  %v547 = vsel %vm545, %v532, 0
  %549 = vmatpush.msra.mxu0 0.0
  %550 = vmatpush.msra.mxu0 0.0
  %551 = vmatpush.msra.mxu0 0.0
  %552 = vmatpush.msra.mxu0 0.0
  %553 = vmatpush.msra.mxu0 0.0
  %554 = vmatpush.msra.mxu0 0.0
  %555 = vmatpush.msra.mxu0 0.0
  %556 = vmatpush.msra.mxu0 0.0
  %557 = vmatpush.msra.mxu0 %v540
  %558 = vmatpush.msra.mxu0 %v539
  %559 = vmatpush.msra.mxu0 %v538
  %560 = vmatpush.msra.mxu0 %v537
  %561 = vmatpush.msra.mxu0 %v536
  %562 = vmatpush.msra.mxu0 %v535
  %563 = vmatpush.msra.mxu0 %v534
  %564 = vmatpush.msra.mxu0 %v533
  %565 = vmatmul.f32.gmra.mxu0 %v547
  %v566 = vpop.f32.mrf.mxu0
  %v567 = vadd.f32 %v543, %v566
  %568 = vdwg.mxu0
  %vm569 = vcmask 25600
  %570 = vst.msk [vmem:[%s13] sm:$0x3] %vm569, %v567
  // Predicated region
  $region54: #{my_model_forward.1} parent=0 // pred_check
    _
  $region55: #{my_model_forward.1} parent=0 // pred_check_branch
    %572 = sbr.rel (0) target = $region57
  $region56: #{my_model_forward.1} parent=0 // pred_region
    _
  $region57: #{my_model_forward.1} parent=0 // pred_fallthru
    _
  // Predicated region
  $region58: #{my_model_forward.1} parent=0 // pred_check
    _
  $region59: #{my_model_forward.1} parent=0 // pred_check_branch
    %574 = sbr.rel (0) target = $region61
  $region60: #{my_model_forward.1} parent=0 // pred_region
    _
  $region61: #{my_model_forward.1} parent=0 // pred_fallthru
    _

</llo_original>
